<compile_context>
chip_gen: v5e
topology: v5e:2x2
jax: 0.10.0
libtpu: 0.0.40
codegen_flags: <defaults>
</compile_context>

<pallas_src>
import jax
import jax.numpy as jnp
from jax import lax
from jax.experimental import pallas as pl
from jax.experimental.pallas import tpu as pltpu


def _round_up(x, m):
    return ((x + m - 1) // m) * m


# Contract the last dim of both operands (A @ B^T) — transpose folded into
# the MXU, no materialized transpose.
_CONTRACT_LAST = (((1,), (1,)), ((), ()))


def _fused_attention_kernel(x_ref, wq_ref, wk_ref, wv_ref, o_ref, k_sc, v_sc):
    """Per grid step (b, qi): one q tile of one batch.

    x_ref : (Sp, Dp)  full padded sequence of batch b (VMEM-resident across qi)
    w*_ref: (Dp, Dp)  padded Linear weights (out, in), resident
    o_ref : (tq, Dp)  output tile
    k_sc, v_sc : (Sp, Dp) f32 scratch — K/V projections, computed once per batch
    """
    qi = pl.program_id(1)
    n_t = pl.num_programs(1)
    tq, dp = o_ref.shape

    # --- once per batch: project the whole resident sequence to K and V ----
    @pl.when(qi == 0)
    def _():
        def proj_step(j, carry):
            s = pl.multiple_of(j * tq, 8)
            xc = x_ref[pl.ds(s, tq), :]                      # (tq, Dp)
            k_sc[pl.ds(s, tq), :] = lax.dot_general(
                xc, wk_ref[...], _CONTRACT_LAST,
                preferred_element_type=jnp.float32)
            v_sc[pl.ds(s, tq), :] = lax.dot_general(
                xc, wv_ref[...], _CONTRACT_LAST,
                preferred_element_type=jnp.float32)
            return carry

        lax.fori_loop(0, n_t, proj_step, 0)

    # --- project this q tile (x slice is already resident in VMEM) ---------
    sq = pl.multiple_of(qi * tq, 8)
    q = lax.dot_general(x_ref[pl.ds(sq, tq), :], wq_ref[...], _CONTRACT_LAST,
                        preferred_element_type=jnp.float32)   # (tq, Dp)

    # --- stream resident K/V in chunks: out += (q @ k_c^T) @ v_c -----------
    def kv_step(j, acc):
        s = pl.multiple_of(j * tq, 8)
        a = lax.dot_general(q, k_sc[pl.ds(s, tq), :], _CONTRACT_LAST,
                            preferred_element_type=jnp.float32)   # (tq, tq)
        return acc + jnp.dot(a, v_sc[pl.ds(s, tq), :],
                             preferred_element_type=jnp.float32)

    acc = lax.fori_loop(0, n_t, kv_step, jnp.zeros((tq, dp), jnp.float32))
    o_ref[...] = acc.astype(o_ref.dtype)


def attention_pallas(inputs, wq, wk, wv, *, seq_tile=256):
    """inputs: (B, S, D); wq/wk/wv: (D, D) nn.Linear weights (out, in)."""
    B, S, D = inputs.shape
    dtype = inputs.dtype

    # ---- padded, lane-dense shapes -----------------------------------------
    Dp = _round_up(D, 128)                       # lane-dense feature dim
    tq = _round_up(min(seq_tile, _round_up(S, 8)), 8)
    Sp = _round_up(S, tq)                        # tq | Sp
    n_t = Sp // tq

    # ---- pad activations / weights (no transpose, no concat) ---------------
    x_p = jnp.pad(inputs, ((0, 0), (0, Sp - S), (0, Dp - D)))   # (B, Sp, Dp)

    def _pad_w(w):                                              # (D, D) -> (Dp, Dp)
        return jnp.pad(w, ((0, Dp - D), (0, Dp - D)))

    wq_p, wk_p, wv_p = _pad_w(wq), _pad_w(wk), _pad_w(wv)

    out_p = pl.pallas_call(
        _fused_attention_kernel,
        out_shape=jax.ShapeDtypeStruct((B, Sp, Dp), dtype),
        grid_spec=pltpu.PrefetchScalarGridSpec(
            num_scalar_prefetch=0,
            grid=(B, n_t),
            in_specs=[
                # full padded sequence, resident across the q-tile axis
                pl.BlockSpec((None, Sp, Dp), lambda b, qi: (b, 0, 0)),
                # weights resident for the whole kernel (constant index_map)
                pl.BlockSpec((Dp, Dp), lambda b, qi: (0, 0)),
                pl.BlockSpec((Dp, Dp), lambda b, qi: (0, 0)),
                pl.BlockSpec((Dp, Dp), lambda b, qi: (0, 0)),
            ],
            out_specs=pl.BlockSpec((None, tq, Dp), lambda b, qi: (b, qi, 0)),
            scratch_shapes=[
                pltpu.VMEM((Sp, Dp), jnp.float32),   # K projection (per batch)
                pltpu.VMEM((Sp, Dp), jnp.float32),   # V projection (per batch)
            ],
        ),
        # Batch axis parallel (dual TC on v7x); q-tile axis must stay
        # "arbitrary" since it reuses the per-batch K/V scratch.
        compiler_params=pltpu.CompilerParams(
            dimension_semantics=("parallel", "arbitrary")),
    )(x_p, wq_p, wk_p, wv_p)

    return out_p[:, :S, :D]


def attention_reference(inputs, wq, wk, wv):
    """Pure-JAX reference mirroring the PyTorch forward pass."""
    q = inputs @ wq.T
    k = inputs @ wk.T
    v = inputs @ wv.T
    a = jnp.einsum("bqd,bkd->bqk", q, k)
    return jnp.einsum("bqk,bkd->bqd", a, v)


if __name__ == "__main__":
    key = jax.random.PRNGKey(0)
    kx, kq, kk, kv, kx2 = jax.random.split(key, 5)

    # Module default: dim=7. Pick batch=2, seq=8.
    B, S, D = 2, 8, 7
    x = jax.random.normal(kx, (B, S, D), dtype=jnp.float32)
    bound = 1.0 / (D ** 0.5)
    wq = jax.random.uniform(kq, (D, D), jnp.float32, -bound, bound)
    wk = jax.random.uniform(kk, (D, D), jnp.float32, -bound, bound)
    wv = jax.random.uniform(kv, (D, D), jnp.float32, -bound, bound)

    out = jax.block_until_ready(attention_pallas(x, wq, wk, wv))
    ref = attention_reference(x, wq, wk, wv)
    assert out.shape == (B, S, D)
    assert jnp.allclose(out, ref, atol=1e-4, rtol=1e-4), "mismatch vs reference"

    # Second run with tiny tiles: exercises multiple q tiles per batch, the
    # once-per-batch K/V projection reuse, the in-kernel kv chunk loop, and
    # the S padding logic.
    x2 = jax.random.normal(kx2, (2, 16, D), dtype=jnp.float32)
    out2 = jax.block_until_ready(attention_pallas(x2, wq, wk, wv, seq_tile=8))
    ref2 = attention_reference(x2, wq, wk, wv)
    assert jnp.allclose(out2, ref2, atol=1e-4, rtol=1e-4), "tiled mismatch"

    print("KERNEL_OK")
</pallas_src>

<mosaic_0001>
module attributes {stable_mosaic.version = 11 : i64} {
  func.func @_fused_attention_kernel(%arg0: i32, %arg1: i32, %arg2: memref<1x8x128xf32, #tpu.memory_space<vmem>>, %arg3: memref<128x128xf32, #tpu.memory_space<vmem>>, %arg4: memref<128x128xf32, #tpu.memory_space<vmem>>, %arg5: memref<128x128xf32, #tpu.memory_space<vmem>>, %arg6: memref<1x8x128xf32, #tpu.memory_space<vmem>>, %arg7: memref<8x128xf32, #tpu.memory_space<vmem>>, %arg8: memref<8x128xf32, #tpu.memory_space<vmem>>) attributes {dimension_semantics = [#tpu.dimension_semantics<parallel>, #tpu.dimension_semantics<arbitrary>], iteration_bounds = array<i64: 2, 1>, scalar_prefetch = 0 : i64, scratch_operands = 2 : i64, tpu.core_type = #tpu.core_type<tc>, window_params = [{transform_indices = @transform_0, window_bounds = array<i64: 1, 8, 128>}, {pipeline_mode = #tpu.pipeline_mode<synchronous>, transform_indices = @transform_1, window_bounds = array<i64: 128, 128>}, {pipeline_mode = #tpu.pipeline_mode<synchronous>, transform_indices = @transform_2, window_bounds = array<i64: 128, 128>}, {pipeline_mode = #tpu.pipeline_mode<synchronous>, transform_indices = @transform_3, window_bounds = array<i64: 128, 128>}, {transform_indices = @transform_4, window_bounds = array<i64: 1, 8, 128>}]} {
    %c0_i32 = arith.constant 0 : i32
    %0 = arith.cmpi eq, %arg1, %c0_i32 : i32
    %1 = arith.extui %0 : i1 to i32
    %c0_i32_0 = arith.constant 0 : i32
    %2 = arith.cmpi ne, %1, %c0_i32_0 : i32
    scf.if %2 {
      %c0_i32_14 = arith.constant 0 : i32
      %c8_i32_15 = arith.constant 8 : i32
      %23 = arith.muli %c0_i32_14, %c8_i32_15 : i32
      %24 = tpu.assume_multiple %23, 8 : i32
      %c0_16 = arith.constant 0 : index
      %25 = arith.index_cast %24 : i32 to index
      %c0_17 = arith.constant 0 : index
      %26 = vector.load %arg2[%c0_16, %25, %c0_17] : memref<1x8x128xf32, #tpu.memory_space<vmem>>, vector<1x8x128xf32>
      %27 = vector.shape_cast %26 : vector<1x8x128xf32> to vector<8x128xf32>
      %c0_18 = arith.constant 0 : index
      %c0_19 = arith.constant 0 : index
      %28 = vector.load %arg4[%c0_18, %c0_19] : memref<128x128xf32, #tpu.memory_space<vmem>>, vector<128x128xf32>
      %cst_20 = arith.constant dense<0.000000e+00> : vector<8x128xf32>
      %29 = tpu.matmul %27, %28, %cst_20 {dimension_numbers = #tpu.dot_dimension_numbers<[1], [1], [0], [0], [0, 0, 1, 0], [], []>} : vector<8x128xf32>, vector<128x128xf32>, vector<8x128xf32> -> vector<8x128xf32>
      %30 = arith.index_cast %24 : i32 to index
      %c0_21 = arith.constant 0 : index
      %31 = vector.load %arg7[%30, %c0_21] : memref<8x128xf32, #tpu.memory_space<vmem>>, vector<8x128xf32>
      tpu.vector_store %arg7[%30, %c0_21], %29 {strides = array<i32>} : memref<8x128xf32, #tpu.memory_space<vmem>>, vector<8x128xf32>,
      %c0_22 = arith.constant 0 : index
      %c0_23 = arith.constant 0 : index
      %32 = vector.load %arg5[%c0_22, %c0_23] : memref<128x128xf32, #tpu.memory_space<vmem>>, vector<128x128xf32>
      %cst_24 = arith.constant dense<0.000000e+00> : vector<8x128xf32>
      %33 = tpu.matmul %27, %32, %cst_24 {dimension_numbers = #tpu.dot_dimension_numbers<[1], [1], [0], [0], [0, 0, 1, 0], [], []>} : vector<8x128xf32>, vector<128x128xf32>, vector<8x128xf32> -> vector<8x128xf32>
      %34 = arith.index_cast %24 : i32 to index
      %c0_25 = arith.constant 0 : index
      %35 = vector.load %arg8[%34, %c0_25] : memref<8x128xf32, #tpu.memory_space<vmem>>, vector<8x128xf32>
      tpu.vector_store %arg8[%34, %c0_25], %33 {strides = array<i32>} : memref<8x128xf32, #tpu.memory_space<vmem>>, vector<8x128xf32>,
      %c1_i32_26 = arith.constant 1 : i32
    } else {
    }
    %c8_i32 = arith.constant 8 : i32
    %3 = arith.muli %arg1, %c8_i32 : i32
    %4 = tpu.assume_multiple %3, 8 : i32
    %c0 = arith.constant 0 : index
    %5 = arith.index_cast %4 : i32 to index
    %c0_1 = arith.constant 0 : index
    %6 = vector.load %arg2[%c0, %5, %c0_1] : memref<1x8x128xf32, #tpu.memory_space<vmem>>, vector<1x8x128xf32>
    %7 = vector.shape_cast %6 : vector<1x8x128xf32> to vector<8x128xf32>
    %c0_2 = arith.constant 0 : index
    %c0_3 = arith.constant 0 : index
    %8 = vector.load %arg3[%c0_2, %c0_3] : memref<128x128xf32, #tpu.memory_space<vmem>>, vector<128x128xf32>
    %cst = arith.constant dense<0.000000e+00> : vector<8x128xf32>
    %9 = tpu.matmul %7, %8, %cst {dimension_numbers = #tpu.dot_dimension_numbers<[1], [1], [0], [0], [0, 0, 1, 0], [], []>} : vector<8x128xf32>, vector<128x128xf32>, vector<8x128xf32> -> vector<8x128xf32>
    %cst_4 = arith.constant 0.000000e+00 : f32
    %10 = vector.broadcast %cst_4 : f32 to vector<8x128xf32>
    %c0_i32_5 = arith.constant 0 : i32
    %c8_i32_6 = arith.constant 8 : i32
    %11 = arith.muli %c0_i32_5, %c8_i32_6 : i32
    %12 = tpu.assume_multiple %11, 8 : i32
    %13 = arith.index_cast %12 : i32 to index
    %c0_7 = arith.constant 0 : index
    %14 = vector.load %arg7[%13, %c0_7] : memref<8x128xf32, #tpu.memory_space<vmem>>, vector<8x128xf32>
    %cst_8 = arith.constant dense<0.000000e+00> : vector<8x8xf32>
    %15 = tpu.matmul %9, %14, %cst_8 {dimension_numbers = #tpu.dot_dimension_numbers<[1], [1], [0], [0], [0, 0, 1, 0], [], []>} : vector<8x128xf32>, vector<8x128xf32>, vector<8x8xf32> -> vector<8x8xf32>
    %16 = arith.index_cast %12 : i32 to index
    %c0_9 = arith.constant 0 : index
    %17 = vector.load %arg8[%16, %c0_9] : memref<8x128xf32, #tpu.memory_space<vmem>>, vector<8x128xf32>
    %cst_10 = arith.constant dense<0.000000e+00> : vector<8x128xf32>
    %18 = tpu.matmul %15, %17, %cst_10 {dimension_numbers = #tpu.dot_dimension_numbers<[1], [0], [0], [1], [0, 0, 1, 1], [], []>} : vector<8x8xf32>, vector<8x128xf32>, vector<8x128xf32> -> vector<8x128xf32>
    %19 = arith.addf %10, %18 : vector<8x128xf32>
    %c1_i32 = arith.constant 1 : i32
    %c0_11 = arith.constant 0 : index
    %c0_12 = arith.constant 0 : index
    %c0_13 = arith.constant 0 : index
    %20 = vector.load %arg6[%c0_11, %c0_12, %c0_13] : memref<1x8x128xf32, #tpu.memory_space<vmem>>, vector<1x8x128xf32>
    %21 = vector.shape_cast %20 : vector<1x8x128xf32> to vector<8x128xf32>
    %22 = vector.shape_cast %19 : vector<8x128xf32> to vector<1x8x128xf32>
    tpu.vector_store %arg6[%c0_11, %c0_12, %c0_13], %22 {strides = array<i32>} : memref<1x8x128xf32, #tpu.memory_space<vmem>>, vector<1x8x128xf32>,
    return
  }
  func.func @transform_0(%arg0: i32, %arg1: i32) -> (i32, i32, i32) {
    %c0_i32 = arith.constant 0 : i32
    %c0_i32_0 = arith.constant 0 : i32
    %c0_i32_1 = arith.constant 0 : i32
    return %arg0, %c0_i32, %c0_i32_0 : i32, i32, i32
  }
  func.func @transform_1(%arg0: i32, %arg1: i32) -> (i32, i32) {
    %c0_i32 = arith.constant 0 : i32
    %c0_i32_0 = arith.constant 0 : i32
    %c0_i32_1 = arith.constant 0 : i32
    return %c0_i32, %c0_i32_0 : i32, i32
  }
  func.func @transform_2(%arg0: i32, %arg1: i32) -> (i32, i32) {
    %c0_i32 = arith.constant 0 : i32
    %c0_i32_0 = arith.constant 0 : i32
    %c0_i32_1 = arith.constant 0 : i32
    return %c0_i32, %c0_i32_0 : i32, i32
  }
  func.func @transform_3(%arg0: i32, %arg1: i32) -> (i32, i32) {
    %c0_i32 = arith.constant 0 : i32
    %c0_i32_0 = arith.constant 0 : i32
    %c0_i32_1 = arith.constant 0 : i32
    return %c0_i32, %c0_i32_0 : i32, i32
  }
  func.func @transform_4(%arg0: i32, %arg1: i32) -> (i32, i32, i32) {
    %c0_i32 = arith.constant 0 : i32
    %c0_i32_0 = arith.constant 0 : i32
    return %arg0, %arg1, %c0_i32 : i32, i32, i32
  }
}

</mosaic_0001>

<llo_original>
// kernel: tpu_custom_call.1
$region0: #{tpu_custom_call.1}
  #allocation0 [shape = 'u32[]', space=smem, size = 0x4, offset = 0x4, fixed_abs, tag = 'smem constant byte address 0x4 - core index']
  #allocation1 [shape = 'u32[72,128]{1,0:T(1,128)}', space=vmem, size = 0x9000, scoped, tag = 'internal scratch']
  #allocation2 [shape = 'f32[8,128]{1,0:T(8,128)}', space=vmem, size = 0x1000, scoped, tag = 'scratch operand']
  #allocation3 [shape = 'f32[8,128]{1,0:T(8,128)}', space=vmem, size = 0x1000, scoped, tag = 'scratch operand']
  %s0 = inlined_call_operand.hbm [shape: f32[2,8,128], index: 0, kind: input, shape index: {}]
  %s1 = inlined_call_operand.hbm [shape: f32[128,128], index: 1, kind: input, shape index: {}]
  %s2 = inlined_call_operand.hbm [shape: f32[128,128], index: 2, kind: input, shape index: {}]
  %s3 = inlined_call_operand.hbm [shape: f32[128,128], index: 3, kind: input, shape index: {}]
  %s4 = inlined_call_operand.hbm [shape: f32[2,8,128], index: 4, kind: output, shape index: {}]
  %s5 = sld [smem:[#allocation0]]
  $region69: #{tpu_custom_call.1} parent=0
    _
  %s7 = ssub.s32 1, %s5
  %s8 = scalar_select 0, %s7, %s5
  $region1: #{tpu_custom_call.1} parent=0
    #allocation4 [shape = 'u8[8192]{0}', space=vmem, size = 0x2000, scoped, tag = 'input window, operand 0']
    #allocation5 [shape = 's32[2]{0}', space=sflag, size = 0x8, scoped, tag = 'scoped memory for tpu_custom_call.1']
    #allocation6 [shape = 's32[2]{0}', space=sflag, size = 0x8, scoped, tag = 'scoped memory for tpu_custom_call.1']
    #allocation7 [shape = 'u8[65536]{0}', space=vmem, size = 0x10000, scoped, tag = 'input window, operand 1, single buffered']
    #allocation8 [shape = 's32[1]{0}', space=sflag, size = 0x4, scoped, tag = 'scoped memory for tpu_custom_call.1']
    #allocation9 [shape = 'u8[65536]{0}', space=vmem, size = 0x10000, scoped, tag = 'input window, operand 2, single buffered']
    #allocation10 [shape = 'u8[65536]{0}', space=vmem, size = 0x10000, scoped, tag = 'input window, operand 3, single buffered']
    #allocation11 [shape = 's32[1]{0}', space=sflag, size = 0x4, scoped, tag = 'scoped memory for tpu_custom_call.1']
    #allocation12 [shape = 'u8[8192]{0}', space=vmem, size = 0x2000, scoped, tag = 'output window, operand 0']
    %9 = vsyncpa [#allocation5], 0
    %s10 = scalar_lea.sflag [#allocation5], 1
    %11 = vsyncpa %s10, 0
    %12 = vsyncpa [#allocation8], 0
    %13 = vsyncpa [#allocation11], 0
    %14 = vsyncpa [#allocation6], 0
    %s15 = scalar_lea.sflag [#allocation6], 1
    %16 = vsyncpa %s15, 0
    loop: start=0, step=1, limit=4
    $region2: #{tpu_custom_call.1} parent=1 // loop_pre_header
      _
    $region3: #{tpu_custom_call.1} parent=1 // loop_header
      %s18 = sphi 0, %s22
      %p19 = scmp.ge.s32.totalorder %s18, 4
      %s25 = sphi 0, %s37
      %s26 = sphi 0, %s33
      %s27 = sphi 0, %s25
      %s28 = sphi 0, %s26
      %s29 = sphi 0, %s27
      %s30 = sphi 0, %s28
      %s40 = sphi 0, %s42
      %s43 = sphi 0, %s40
      %s44 = sphi 0, %s43
      %s60 = sphi 0, %s44
      %s64 = sphi 0, %s64
      %s66 = sphi 0, %s64
      %s67 = sphi 0, %s66
      %s81 = sphi 0, %s67
      %s85 = sphi 0, %s85
      %s87 = sphi 0, %s85
      %s88 = sphi 0, %s87
      %s102 = sphi 0, %s88
      %s106 = sphi 0, %s106
      %s108 = sphi 0, %s106
      %s109 = sphi 0, %s108
      %s123 = sphi 0, %s109
      %s131 = sphi 0, %s133
      %s134 = sphi 0, %s131
      %s135 = sphi 0, %s134
      %s151 = sphi 0, %s135
    $region4: #{tpu_custom_call.1} parent=1 // loop_header_branch
      %21 = sbr.rel (%p19) target = $region8
    $region5: #{tpu_custom_call.1} parent=1 // loop_body
      %s23 = ssub.s32 %s18, 1
      %s24 = ssub.s32 %s18, 2
      %s31 = sadd.s32 1, %s26
      %p32 = scmp.ge.s32.totalorder %s31, 1
      %s33 = scalar_select %p32, 0, %s31
      %s34 = sadd.s32 1, %s25
      %s35 = scalar_select %p32, %s34, %s25
      %p36 = scmp.ge.s32.totalorder %s35, 2
      %s37 = scalar_select %p36, 0, %s35
      %s38 = ssub.s32 %s25, %s37
      %p39 = scmp.eq.s32.totalorder %s38, 0
      %s41 = sadd.s32 %s40, 1
      %s42 = scalar_select %p39, %s40, %s41
      %p45 = pneg %p39
      %p46 = scmp.eq.s32.totalorder %s18, 1
      %p47 = por %p45, %p46
      %p48 = scmp.ne.s32.totalorder %s40, %s43
      %p49 = scmp.eq.s32.totalorder %s18, 0
      %p50 = por %p48, %p49
      %p51 = scmp.ne.s32.totalorder %s40, %s43
      %p52 = scmp.eq.s32.totalorder %s23, 1
      %p53 = por %p51, %p52
      %p54 = scmp.ne.s32.totalorder %s43, %s44
      %p55 = scmp.eq.s32.totalorder %s23, 0
      %p56 = por %p54, %p55
      %p57 = scmp.ne.s32.totalorder %s43, %s44
      %p58 = scmp.eq.s32.totalorder %s24, 1
      %p59 = por %p57, %p58
      %p61 = scmp.ne.s32.totalorder %s44, %s60
      %p62 = scmp.eq.s32.totalorder %s24, 0
      %p63 = por %p61, %p62
      %s65 = sadd.s32 %s64, 1
      %p68 = scmp.eq.s32.totalorder %s18, 1
      %p69 = scmp.ne.s32.totalorder %s64, %s66
      %p70 = scmp.eq.s32.totalorder %s18, 0
      %p71 = por %p69, %p70
      %p72 = scmp.ne.s32.totalorder %s64, %s66
      %p73 = scmp.eq.s32.totalorder %s23, 1
      %p74 = por %p72, %p73
      %p75 = scmp.ne.s32.totalorder %s66, %s67
      %p76 = scmp.eq.s32.totalorder %s23, 0
      %p77 = por %p75, %p76
      %p78 = scmp.ne.s32.totalorder %s66, %s67
      %p79 = scmp.eq.s32.totalorder %s24, 1
      %p80 = por %p78, %p79
      %p82 = scmp.ne.s32.totalorder %s67, %s81
      %p83 = scmp.eq.s32.totalorder %s24, 0
      %p84 = por %p82, %p83
      %s86 = sadd.s32 %s85, 1
      %p89 = scmp.eq.s32.totalorder %s18, 1
      %p90 = scmp.ne.s32.totalorder %s85, %s87
      %p91 = scmp.eq.s32.totalorder %s18, 0
      %p92 = por %p90, %p91
      %p93 = scmp.ne.s32.totalorder %s85, %s87
      %p94 = scmp.eq.s32.totalorder %s23, 1
      %p95 = por %p93, %p94
      %p96 = scmp.ne.s32.totalorder %s87, %s88
      %p97 = scmp.eq.s32.totalorder %s23, 0
      %p98 = por %p96, %p97
      %p99 = scmp.ne.s32.totalorder %s87, %s88
      %p100 = scmp.eq.s32.totalorder %s24, 1
      %p101 = por %p99, %p100
      %p103 = scmp.ne.s32.totalorder %s88, %s102
      %p104 = scmp.eq.s32.totalorder %s24, 0
      %p105 = por %p103, %p104
      %s107 = sadd.s32 %s106, 1
      %p110 = scmp.eq.s32.totalorder %s18, 1
      %p111 = scmp.ne.s32.totalorder %s106, %s108
      %p112 = scmp.eq.s32.totalorder %s18, 0
      %p113 = por %p111, %p112
      %p114 = scmp.ne.s32.totalorder %s106, %s108
      %p115 = scmp.eq.s32.totalorder %s23, 1
      %p116 = por %p114, %p115
      %p117 = scmp.ne.s32.totalorder %s108, %s109
      %p118 = scmp.eq.s32.totalorder %s23, 0
      %p119 = por %p117, %p118
      %p120 = scmp.ne.s32.totalorder %s108, %s109
      %p121 = scmp.eq.s32.totalorder %s24, 1
      %p122 = por %p120, %p121
      %p124 = scmp.ne.s32.totalorder %s109, %s123
      %p125 = scmp.eq.s32.totalorder %s24, 0
      %p126 = por %p124, %p125
      %s127 = ssub.s32 %s25, %s37
      %s128 = ssub.s32 %s26, %s33
      %s129 = sor.u32 %s127, %s128
      %p130 = scmp.eq.s32.totalorder %s129, 0
      %s132 = sadd.s32 %s131, 1
      %s133 = scalar_select %p130, %s131, %s132
      %p136 = pneg %p130
      %p137 = scmp.eq.s32.totalorder %s18, 1
      %p138 = por %p136, %p137
      %p139 = scmp.ne.s32.totalorder %s131, %s134
      %p140 = scmp.eq.s32.totalorder %s18, 0
      %p141 = por %p139, %p140
      %p142 = scmp.ne.s32.totalorder %s131, %s134
      %p143 = scmp.eq.s32.totalorder %s23, 1
      %p144 = por %p142, %p143
      %p145 = scmp.ne.s32.totalorder %s134, %s135
      %p146 = scmp.eq.s32.totalorder %s23, 0
      %p147 = por %p145, %p146
      %p148 = scmp.ne.s32.totalorder %s134, %s135
      %p149 = scmp.eq.s32.totalorder %s24, 1
      %p150 = por %p148, %p149
      %p152 = scmp.ne.s32.totalorder %s135, %s151
      %p153 = scmp.eq.s32.totalorder %s24, 0
      %p154 = por %p152, %p153
      %p155 = scmp.le.s32.totalorder 1, %s18
      %p156 = scmp.lt.s32.totalorder %s18, 3
      %p157 = pnand %p155, %p156
      %p158 = pneg %p157
      // Predicated region
      $region9: #{tpu_custom_call.1} parent=5 // pred_check
        _
      $region10: #{tpu_custom_call.1} parent=5 // pred_check_branch
        %160 = sbr.rel (%p157) target = $region12
      $region11: #{tpu_custom_call.1} parent=5 // pred_region
        %s161 = ssub.s32 %s18, 1
        // Predicated region
        $region13: #{tpu_custom_call.1} parent=11 // pred_check
          %p162 = pneg %p77
        $region14: #{tpu_custom_call.1} parent=11 // pred_check_branch
          %164 = sbr.rel (%p162) target = $region16
        $region15: #{tpu_custom_call.1} parent=11 // pred_region
          %166 = vsyncadd [#allocation8], 0
          %s167 = sshll.u32 %s1, 4
          %s168 = int_to_ptr.hbm [resolvable:$true] %s167
          %s169 = sshll.u32 [#allocation7], 4
          %s170 = int_to_ptr.vmem [resolvable:$true] %s169
          %175 = dma.hbm_to_vmem [thread:$0]  %s168, 2048, %s170, [#allocation8], 128, 128, 8
        $region16: #{tpu_custom_call.1} parent=11 // pred_fallthru
          _
        // Predicated region
        $region17: #{tpu_custom_call.1} parent=11 // pred_check
          %p176 = pneg %p98
        $region18: #{tpu_custom_call.1} parent=11 // pred_check_branch
          %178 = sbr.rel (%p176) target = $region20
        $region19: #{tpu_custom_call.1} parent=11 // pred_region
          %180 = vsyncadd [#allocation8], 0
          %s181 = sshll.u32 %s2, 4
          %s182 = int_to_ptr.hbm [resolvable:$true] %s181
          %s183 = sshll.u32 [#allocation9], 4
          %s184 = int_to_ptr.vmem [resolvable:$true] %s183
          %189 = dma.hbm_to_vmem [thread:$0]  %s182, 2048, %s184, [#allocation8], 128, 128, 8
        $region20: #{tpu_custom_call.1} parent=11 // pred_fallthru
          _
        // Predicated region
        $region21: #{tpu_custom_call.1} parent=11 // pred_check
          %p190 = pneg %p119
        $region22: #{tpu_custom_call.1} parent=11 // pred_check_branch
          %192 = sbr.rel (%p190) target = $region24
        $region23: #{tpu_custom_call.1} parent=11 // pred_region
          %194 = vsyncadd [#allocation11], 0
          %s195 = sshll.u32 %s3, 4
          %s196 = int_to_ptr.hbm [resolvable:$true] %s195
          %s197 = sshll.u32 [#allocation10], 4
          %s198 = int_to_ptr.vmem [resolvable:$true] %s197
          %203 = dma.hbm_to_vmem [thread:$0]  %s196, 2048, %s198, [#allocation11], 128, 128, 8
        $region24: #{tpu_custom_call.1} parent=11 // pred_fallthru
          _
      $region12: #{tpu_custom_call.1} parent=5 // pred_fallthru
        _
      %p204 = scmp.lt.s32.totalorder %s18, 2
      // Predicated region
      $region25: #{tpu_custom_call.1} parent=5 // pred_check
        %p205 = pneg %p204
      $region26: #{tpu_custom_call.1} parent=5 // pred_check_branch
        %207 = sbr.rel (%p205) target = $region28
      $region27: #{tpu_custom_call.1} parent=5 // pred_region
        // Predicated region
        $region29: #{tpu_custom_call.1} parent=27 // pred_check
          %p208 = pneg %p50
        $region30: #{tpu_custom_call.1} parent=27 // pred_check_branch
          %210 = sbr.rel (%p208) target = $region32
        $region31: #{tpu_custom_call.1} parent=27 // pred_region
          %s211 = sand.u32 %s40, 1
          %s212 = scalar_lea.sflag [#allocation5], %s211
          %s213 = sand.u32 %s40, 1
          %s214 = smul.addr %s213, 8
          %s215 = scalar_lea.vmem [#allocation4], %s214
          %217 = vsyncadd %s212, 0
          %s218 = smul.addr %s25, 8
          %s219 = scalar_lea.hbm %s0, %s218
          %s221 = sshll.u32 %s219, 4
          %s222 = int_to_ptr.hbm [resolvable:$true] %s221
          %s223 = sshll.u32 %s215, 4
          %s224 = int_to_ptr.vmem [resolvable:$true] %s223
          %226 = dma.hbm_to_vmem [thread:$0]  %s222, 128, %s224, %s212
        $region32: #{tpu_custom_call.1} parent=27 // pred_fallthru
          _
      $region28: #{tpu_custom_call.1} parent=5 // pred_fallthru
        _
      %p227 = scmp.le.s32.totalorder 1, %s18
      %p228 = scmp.lt.s32.totalorder %s18, 3
      %p229 = pnand %p227, %p228
      %p230 = pneg %p229
      // Predicated region
      $region33: #{tpu_custom_call.1} parent=5 // pred_check
        _
      $region34: #{tpu_custom_call.1} parent=5 // pred_check_branch
        %232 = sbr.rel (%p229) target = $region36
      $region35: #{tpu_custom_call.1} parent=5 // pred_region
        %s233 = ssub.s32 %s18, 1
        %s234 = sand.u32 %s43, 1
        %s235 = scalar_lea.sflag [#allocation5], %s234
        %s236 = sand.u32 %s43, 1
        %s237 = smul.addr %s236, 8
        %s238 = scalar_lea.vmem [#allocation4], %s237
        // Predicated region
        $region37: #{tpu_custom_call.1} parent=35 // pred_check
          %p239 = pneg %p56
        $region38: #{tpu_custom_call.1} parent=35 // pred_check_branch
          %241 = sbr.rel (%p239) target = $region40
        $region39: #{tpu_custom_call.1} parent=35 // pred_region
          %243 = dma.done %s235, 128
        $region40: #{tpu_custom_call.1} parent=35 // pred_fallthru
          _
        // Predicated region
        $region41: #{tpu_custom_call.1} parent=35 // pred_check
          %p244 = pneg %p77
        $region42: #{tpu_custom_call.1} parent=35 // pred_check_branch
          %246 = sbr.rel (%p244) target = $region44
        $region43: #{tpu_custom_call.1} parent=35 // pred_region
          %248 = dma.done [#allocation8], 2048
        $region44: #{tpu_custom_call.1} parent=35 // pred_fallthru
          _
        // Predicated region
        $region45: #{tpu_custom_call.1} parent=35 // pred_check
          %p249 = pneg %p98
        $region46: #{tpu_custom_call.1} parent=35 // pred_check_branch
          %251 = sbr.rel (%p249) target = $region48
        $region47: #{tpu_custom_call.1} parent=35 // pred_region
          %253 = dma.done [#allocation8], 2048
        $region48: #{tpu_custom_call.1} parent=35 // pred_fallthru
          _
        // Predicated region
        $region49: #{tpu_custom_call.1} parent=35 // pred_check
          %p254 = pneg %p119
        $region50: #{tpu_custom_call.1} parent=35 // pred_check_branch
          %256 = sbr.rel (%p254) target = $region52
        $region51: #{tpu_custom_call.1} parent=35 // pred_region
          %258 = dma.done [#allocation11], 2048
        $region52: #{tpu_custom_call.1} parent=35 // pred_fallthru
          _
        %s259 = sand.u32 %s43, 1
        %s260 = scalar_lea.sflag [#allocation5], %s259
        %s261 = sand.u32 %s43, 1
        %s262 = smul.addr %s261, 8
        %s263 = scalar_lea.vmem [#allocation4], %s262
        %p264 = pneg %p56
        %p265 = pneg %p53
        %p266 = pneg %p77
        %p267 = pneg %p74
        %p268 = pneg %p98
        %p269 = pneg %p95
        %p270 = pneg %p119
        %p271 = pneg %p116
        %p272 = pneg %p147
        %p273 = pneg %p144
        %s274 = sand.u32 %s134, 1
        %s275 = scalar_lea.sflag [#allocation6], %s274
        %s276 = sand.u32 %s134, 1
        %s277 = smul.addr %s276, 8
        %s278 = scalar_lea.vmem [#allocation12], %s277
        %p279 = scmp.eq.s32.totalorder %s28, 0
        // Predicated region
        $region53: #{tpu_custom_call.1} parent=35 // pred_check
          %p280 = pneg %p279
        $region54: #{tpu_custom_call.1} parent=35 // pred_check_branch
          %282 = sbr.rel (%p280) target = $region56
        $region55: #{tpu_custom_call.1} parent=35 // pred_region
          %v283 = vld [vmem:[%s238] sm:$0xff]
          %v284 = vld [vmem:[#allocation9] sm:$0xff]
          %v285 = vld [vmem:[#allocation9 + $0x8] sm:$0xff]
          %v286 = vld [vmem:[#allocation9 + $0x10] sm:$0xff]
          %v287 = vld [vmem:[#allocation9 + $0x18] sm:$0xff]
          %v288 = vld [vmem:[#allocation9 + $0x20] sm:$0xff]
          %v289 = vld [vmem:[#allocation9 + $0x28] sm:$0xff]
          %v290 = vld [vmem:[#allocation9 + $0x30] sm:$0xff]
          %v291 = vld [vmem:[#allocation9 + $0x38] sm:$0xff]
          %v292 = vld [vmem:[#allocation9 + $0x40] sm:$0xff]
          %v293 = vld [vmem:[#allocation9 + $0x48] sm:$0xff]
          %v294 = vld [vmem:[#allocation9 + $0x50] sm:$0xff]
          %v295 = vld [vmem:[#allocation9 + $0x58] sm:$0xff]
          %v296 = vld [vmem:[#allocation9 + $0x60] sm:$0xff]
          %v297 = vld [vmem:[#allocation9 + $0x68] sm:$0xff]
          %v298 = vld [vmem:[#allocation9 + $0x70] sm:$0xff]
          %v299 = vld [vmem:[#allocation9 + $0x78] sm:$0xff]
          %300 = vmatpush.xpose.msra.mxu0 %v299
          %301 = vmatpush.xpose.msra.mxu0 %v298
          %302 = vmatpush.xpose.msra.mxu0 %v297
          %303 = vmatpush.xpose.msra.mxu0 %v296
          %304 = vmatpush.xpose.msra.mxu0 %v295
          %305 = vmatpush.xpose.msra.mxu0 %v294
          %306 = vmatpush.xpose.msra.mxu0 %v293
          %307 = vmatpush.xpose.msra.mxu0 %v292
          %308 = vmatpush.xpose.msra.mxu0 %v291
          %309 = vmatpush.xpose.msra.mxu0 %v290
          %310 = vmatpush.xpose.msra.mxu0 %v289
          %311 = vmatpush.xpose.msra.mxu0 %v288
          %312 = vmatpush.xpose.msra.mxu0 %v287
          %313 = vmatpush.xpose.msra.mxu0 %v286
          %314 = vmatpush.xpose.msra.mxu0 %v285
          %315 = vmatpush.xpose.msra.mxu0 %v284
          %316 = vmatmul.f32.gmra.mxu0 %v283
          %v317 = vpop.f32.mrf.mxu0
          %v318 = vadd.f32 0.0, %v317
          %319 = vdwg.mxu0
          %320 = vst [vmem:[#allocation2] sm:$0xff] %v318
          %v321 = vld [vmem:[#allocation10] sm:$0xff]
          %v322 = vld [vmem:[#allocation10 + $0x8] sm:$0xff]
          %v323 = vld [vmem:[#allocation10 + $0x10] sm:$0xff]
          %v324 = vld [vmem:[#allocation10 + $0x18] sm:$0xff]
          %v325 = vld [vmem:[#allocation10 + $0x20] sm:$0xff]
          %v326 = vld [vmem:[#allocation10 + $0x28] sm:$0xff]
          %v327 = vld [vmem:[#allocation10 + $0x30] sm:$0xff]
          %v328 = vld [vmem:[#allocation10 + $0x38] sm:$0xff]
          %v329 = vld [vmem:[#allocation10 + $0x40] sm:$0xff]
          %v330 = vld [vmem:[#allocation10 + $0x48] sm:$0xff]
          %v331 = vld [vmem:[#allocation10 + $0x50] sm:$0xff]
          %v332 = vld [vmem:[#allocation10 + $0x58] sm:$0xff]
          %v333 = vld [vmem:[#allocation10 + $0x60] sm:$0xff]
          %v334 = vld [vmem:[#allocation10 + $0x68] sm:$0xff]
          %v335 = vld [vmem:[#allocation10 + $0x70] sm:$0xff]
          %v336 = vld [vmem:[#allocation10 + $0x78] sm:$0xff]
          %337 = vmatpush.xpose.msra.mxu0 %v336
          %338 = vmatpush.xpose.msra.mxu0 %v335
          %339 = vmatpush.xpose.msra.mxu0 %v334
          %340 = vmatpush.xpose.msra.mxu0 %v333
          %341 = vmatpush.xpose.msra.mxu0 %v332
          %342 = vmatpush.xpose.msra.mxu0 %v331
          %343 = vmatpush.xpose.msra.mxu0 %v330
          %344 = vmatpush.xpose.msra.mxu0 %v329
          %345 = vmatpush.xpose.msra.mxu0 %v328
          %346 = vmatpush.xpose.msra.mxu0 %v327
          %347 = vmatpush.xpose.msra.mxu0 %v326
          %348 = vmatpush.xpose.msra.mxu0 %v325
          %349 = vmatpush.xpose.msra.mxu0 %v324
          %350 = vmatpush.xpose.msra.mxu0 %v323
          %351 = vmatpush.xpose.msra.mxu0 %v322
          %352 = vmatpush.xpose.msra.mxu0 %v321
          %353 = vmatmul.f32.gmra.mxu0 %v283
          %v354 = vpop.f32.mrf.mxu0
          %v355 = vadd.f32 0.0, %v354
          %356 = vdwg.mxu0
          %357 = vst [vmem:[#allocation3] sm:$0xff] %v355
        $region56: #{tpu_custom_call.1} parent=35 // pred_fallthru
          _
        %s358 = smul.u32 %s28, 8
        %s359 = scalar_lea.vmem %s238, %s358 [#allocation4]
        %v360 = vld [vmem:[%s359] sm:$0xff]
        %v361 = vld [vmem:[#allocation7] sm:$0xff]
        %v362 = vld [vmem:[#allocation7 + $0x8] sm:$0xff]
        %v363 = vld [vmem:[#allocation7 + $0x10] sm:$0xff]
        %v364 = vld [vmem:[#allocation7 + $0x18] sm:$0xff]
        %v365 = vld [vmem:[#allocation7 + $0x20] sm:$0xff]
        %v366 = vld [vmem:[#allocation7 + $0x28] sm:$0xff]
        %v367 = vld [vmem:[#allocation7 + $0x30] sm:$0xff]
        %v368 = vld [vmem:[#allocation7 + $0x38] sm:$0xff]
        %v369 = vld [vmem:[#allocation7 + $0x40] sm:$0xff]
        %v370 = vld [vmem:[#allocation7 + $0x48] sm:$0xff]
        %v371 = vld [vmem:[#allocation7 + $0x50] sm:$0xff]
        %v372 = vld [vmem:[#allocation7 + $0x58] sm:$0xff]
        %v373 = vld [vmem:[#allocation7 + $0x60] sm:$0xff]
        %v374 = vld [vmem:[#allocation7 + $0x68] sm:$0xff]
        %v375 = vld [vmem:[#allocation7 + $0x70] sm:$0xff]
        %v376 = vld [vmem:[#allocation7 + $0x78] sm:$0xff]
        %377 = vmatpush.xpose.msra.mxu0 %v376
        %378 = vmatpush.xpose.msra.mxu0 %v375
        %379 = vmatpush.xpose.msra.mxu0 %v374
        %380 = vmatpush.xpose.msra.mxu0 %v373
        %381 = vmatpush.xpose.msra.mxu0 %v372
        %382 = vmatpush.xpose.msra.mxu0 %v371
        %383 = vmatpush.xpose.msra.mxu0 %v370
        %384 = vmatpush.xpose.msra.mxu0 %v369
        %385 = vmatpush.xpose.msra.mxu0 %v368
        %386 = vmatpush.xpose.msra.mxu0 %v367
        %387 = vmatpush.xpose.msra.mxu0 %v366
        %388 = vmatpush.xpose.msra.mxu0 %v365
        %389 = vmatpush.xpose.msra.mxu0 %v364
        %390 = vmatpush.xpose.msra.mxu0 %v363
        %391 = vmatpush.xpose.msra.mxu0 %v362
        %392 = vmatpush.xpose.msra.mxu0 %v361
        %393 = vmatmul.f32.gmra.mxu0 %v360
        %v394 = vpop.f32.mrf.mxu0
        %v395 = vadd.f32 0.0, %v394
        %396 = vdwg.mxu0
        %v397 = vld [vmem:[#allocation2] sm:$0xff]
        %398 = vmatpush.xpose.msra.mxu0 0.0
        %399 = vmatpush.xpose.msra.mxu0 0.0
        %400 = vmatpush.xpose.msra.mxu0 0.0
        %401 = vmatpush.xpose.msra.mxu0 0.0
        %402 = vmatpush.xpose.msra.mxu0 0.0
        %403 = vmatpush.xpose.msra.mxu0 0.0
        %404 = vmatpush.xpose.msra.mxu0 0.0
        %405 = vmatpush.xpose.msra.mxu0 0.0
        %406 = vmatpush.xpose.msra.mxu0 0.0
        %407 = vmatpush.xpose.msra.mxu0 0.0
        %408 = vmatpush.xpose.msra.mxu0 0.0
        %409 = vmatpush.xpose.msra.mxu0 0.0
        %410 = vmatpush.xpose.msra.mxu0 0.0
        %411 = vmatpush.xpose.msra.mxu0 0.0
        %412 = vmatpush.xpose.msra.mxu0 0.0
        %413 = vmatpush.xpose.msra.mxu0 %v397
        %414 = vmatmul.f32.gmra.mxu0 %v395
        %v415 = vpop.f32.mrf.mxu0
        %v416 = vadd.f32 0.0, %v415
        %417 = vdwg.mxu0
        %v418 = vld [vmem:[#allocation3] sm:$0xff]
        %vm419 = vcmask 64512
        %v421 = vsel %vm419, %v416, 0
        %423 = vmatpush.msra.mxu0 0.0
        %424 = vmatpush.msra.mxu0 0.0
        %425 = vmatpush.msra.mxu0 0.0
        %426 = vmatpush.msra.mxu0 0.0
        %427 = vmatpush.msra.mxu0 0.0
        %428 = vmatpush.msra.mxu0 0.0
        %429 = vmatpush.msra.mxu0 0.0
        %430 = vmatpush.msra.mxu0 0.0
        %431 = vmatpush.msra.mxu0 0.0
        %432 = vmatpush.msra.mxu0 0.0
        %433 = vmatpush.msra.mxu0 0.0
        %434 = vmatpush.msra.mxu0 0.0
        %435 = vmatpush.msra.mxu0 0.0
        %436 = vmatpush.msra.mxu0 0.0
        %437 = vmatpush.msra.mxu0 0.0
        %438 = vmatpush.msra.mxu0 %v418
        %439 = vmatmul.f32.gmra.mxu0 %v421
        %v440 = vpop.f32.mrf.mxu0
        %v441 = vadd.f32 0.0, %v440
        %442 = vdwg.mxu0
        %443 = vst [vmem:[%s278] sm:$0xff] %v441
        %s444 = sand.u32 %s134, 1
        %s445 = scalar_lea.sflag [#allocation6], %s444
        %s446 = sand.u32 %s134, 1
        %s447 = smul.addr %s446, 8
        %s448 = scalar_lea.vmem [#allocation12], %s447
        // Predicated region
        $region57: #{tpu_custom_call.1} parent=35 // pred_check
          %p449 = pneg %p144
        $region58: #{tpu_custom_call.1} parent=35 // pred_check_branch
          %451 = sbr.rel (%p449) target = $region60
        $region59: #{tpu_custom_call.1} parent=35 // pred_region
          %453 = vsyncadd %s445, 0
          %s454 = sadd.s32 %s28, %s27
          %s455 = smul.addr %s454, 8
          %s456 = scalar_lea.hbm %s4, %s455
          %s458 = sshll.u32 %s448, 4
          %s459 = int_to_ptr.vmem [resolvable:$true] %s458
          %s460 = sshll.u32 %s456, 4
          %s461 = int_to_ptr.hbm [resolvable:$true] %s460
          %463 = dma.vmem_to_hbm [thread:$0]  %s459, 128, %s461, %s445
        $region60: #{tpu_custom_call.1} parent=35 // pred_fallthru
          _
      $region36: #{tpu_custom_call.1} parent=5 // pred_fallthru
        _
      %p464 = scmp.le.s32.totalorder 2, %s18
      // Predicated region
      $region61: #{tpu_custom_call.1} parent=5 // pred_check
        %p465 = pneg %p464
      $region62: #{tpu_custom_call.1} parent=5 // pred_check_branch
        %467 = sbr.rel (%p465) target = $region64
      $region63: #{tpu_custom_call.1} parent=5 // pred_region
        %s468 = ssub.s32 %s18, 2
        // Predicated region
        $region65: #{tpu_custom_call.1} parent=63 // pred_check
          %p469 = pneg %p150
        $region66: #{tpu_custom_call.1} parent=63 // pred_check_branch
          %471 = sbr.rel (%p469) target = $region68
        $region67: #{tpu_custom_call.1} parent=63 // pred_region
          %s472 = sand.u32 %s135, 1
          %s473 = scalar_lea.sflag [#allocation6], %s472
          %s474 = sand.u32 %s135, 1
          %s475 = smul.addr %s474, 8
          %s476 = scalar_lea.vmem [#allocation12], %s475
          %478 = dma.done %s473, 128
        $region68: #{tpu_custom_call.1} parent=63 // pred_fallthru
          _
      $region64: #{tpu_custom_call.1} parent=5 // pred_fallthru
        _
    $region6: #{tpu_custom_call.1} parent=1 // loop_footer
      %s22 = sadd.s32 1, %s18
    $region7: #{tpu_custom_call.1} parent=1 // loop_footer_branch
      %17 = sbr.rel target = $region3
    $region8: #{tpu_custom_call.1} parent=1 // loop_exit
      _
    %479 = vsyncpa [#allocation5], 1
    %s480 = scalar_lea.sflag [#allocation5], 1
    %481 = vsyncpa %s480, 1
    %482 = vsyncpa [#allocation8], 1
    %483 = vsyncpa [#allocation11], 1
    %484 = vsyncpa [#allocation6], 1
    %s485 = scalar_lea.sflag [#allocation6], 1
    %486 = vsyncpa %s485, 1

</llo_original>
